<compile_context>
chip_gen: v5e
topology: v5e:2x2
jax: 0.10.0
libtpu: 0.0.40
codegen_flags: <defaults>
</compile_context>

<pallas_src>
import math
import numpy as np
import jax
import jax.numpy as jnp
from jax import lax
from jax.experimental import pallas as pl
from jax.experimental.pallas import tpu as pltpu


# ----------------------------------------------------------------------------
# Kernel 1: gridded LSTM recurrence.
# Grid = (batch_shards, T_chunks); (h, c) carried in VMEM scratch across the
# (sequential, "arbitrary") T_chunk axis.  Input projection already hoisted.
# ----------------------------------------------------------------------------
def _lstm_recurrence_kernel(xg_ref, whh_ref, h0_ref, c0_ref, hs_ref,
                            h_sc, c_sc):
    H = h0_ref.shape[1]
    t_chunk = xg_ref.shape[0]

    @pl.when(pl.program_id(1) == 0)
    def _():
        h_sc[...] = h0_ref[...]
        c_sc[...] = c0_ref[...]

    # Hoist the loop-invariant weight load out of the per-step loop.
    whh = whh_ref[...]                                   # (H, 4H) bf16

    def step(t, carry):
        h, c = carry
        # xg already contains x @ W_ih.T + (b_ih + b_hh); only the sequential
        # h @ W_hh.T is on the critical path.
        gates = (xg_ref[t].astype(jnp.float32)
                 + jnp.dot(h.astype(jnp.bfloat16), whh,
                           preferred_element_type=jnp.float32))
        # PyTorch LSTMCell gate order: i | f | g | o.  H is a multiple of 128
        # so these slices land on lane-tile boundaries.
        i_g = jax.nn.sigmoid(gates[:, 0:H])
        f_g = jax.nn.sigmoid(gates[:, H:2 * H])
        g_g = jnp.tanh(gates[:, 2 * H:3 * H])
        o_g = jax.nn.sigmoid(gates[:, 3 * H:4 * H])
        c_new = f_g * c + i_g * g_g
        h_new = o_g * jnp.tanh(c_new)
        hs_ref[t] = h_new                                # f32 (bs, H): exact tile store
        return (h_new, c_new)

    h_fin, c_fin = lax.fori_loop(0, t_chunk, step, (h_sc[...], c_sc[...]))
    h_sc[...] = h_fin
    c_sc[...] = c_fin


# ----------------------------------------------------------------------------
# Kernel 2: tiled vocab projection + streaming log-sum-exp.
# Grid = (row_tiles, vocab_tiles); vocab axis is the sequential reduction.
# W_d is streamed tile-by-tile (never fully VMEM-resident).
# ----------------------------------------------------------------------------
def _vocab_lse_kernel(h_ref, wd_ref, bd_ref, lse_ref, m_sc, l_sc):
    j = pl.program_id(1)

    @pl.when(j == 0)
    def _():
        m_sc[...] = jnp.full(m_sc.shape, -jnp.inf, m_sc.dtype)
        l_sc[...] = jnp.zeros(l_sc.shape, l_sc.dtype)

    # (TM, H) bf16 @ (H, TN) bf16 -> f32 on the MXU.
    logits = (jnp.dot(h_ref[...], wd_ref[...],
                      preferred_element_type=jnp.float32) + bd_ref[...])
    m_new = jnp.maximum(m_sc[...], jnp.max(logits, axis=-1, keepdims=True))
    alpha = jnp.exp(m_sc[...] - m_new)
    l_sc[...] = alpha * l_sc[...] + jnp.sum(jnp.exp(logits - m_new),
                                            axis=-1, keepdims=True)
    m_sc[...] = m_new

    @pl.when(j == pl.num_programs(1) - 1)
    def _():
        # Written once per row tile (R*4 bytes total); not on any hot path.
        lse_ref[...] = m_sc[...] + jnp.log(l_sc[...])


# ----------------------------------------------------------------------------
# One-time parameter preparation (cache transposed / bf16 weights).
# ----------------------------------------------------------------------------
def prepare_decoder_params(params):
    prep = dict(params)
    prep["wih_t_bf"] = params["w_ih"].T.astype(jnp.bfloat16)   # (E, 4H)
    prep["whh_t_bf"] = params["w_hh"].T.astype(jnp.bfloat16)   # (H, 4H)
    prep["wd_t_bf"] = params["wd"].T.astype(jnp.bfloat16)      # (H, V)
    prep["bias_fold"] = (params["b_ih"] + params["b_hh"]).astype(jnp.float32)
    return prep


# ----------------------------------------------------------------------------
# Wrapper: Decoder.log_prob (drop is a no-op, p=0).
# ----------------------------------------------------------------------------
def decoder_log_prob(prep, y, lens, init_state, *, tm=512, tn=512, t_chunk=16):
    h0, c0 = init_state
    B, T = y.shape
    E = prep["embed"].shape[1]
    H = h0.shape[1]
    V = prep["wd"].shape[0]
    Tm1 = T - 1
    R = Tm1 * B
    G4 = 4 * H

    # ---- glue: embedding gather + hoisted batched input projection (XLA) ----
    y_tm = jnp.transpose(y, (1, 0)).astype(jnp.int32)            # (T, B)
    x = prep["embed"][y_tm[:-1]]                                 # (T-1, B, E) f32
    xg = (jnp.dot(x.reshape(R, E).astype(jnp.bfloat16), prep["wih_t_bf"],
                  preferred_element_type=jnp.float32)
          + prep["bias_fold"])
    # bf16 xg halves the Kernel-1 HBM round-trip; bias fold (incl. forget-gate
    # bias 2.0) is exactly representable in bf16.
    xg = xg.astype(jnp.bfloat16).reshape(Tm1, B, G4)             # (T-1, B, 4H)

    # Pad T to a multiple of the T-chunk (padded steps produce garbage hidden
    # states at the tail; they are sliced off and never consumed).
    tc = min(t_chunk, Tm1)
    tp = pl.cdiv(Tm1, tc) * tc
    if tp > Tm1:
        xg = jnp.pad(xg, ((0, tp - Tm1), (0, 0), (0, 0)))

    # Optional batch sharding of the recurrence (both v7x TensorCores) when
    # the per-shard batch still fills an (8, 128) sublane tile.
    n_bs = 2 if (B >= 16 and B % 2 == 0 and (B // 2) % 8 == 0) else 1
    bs = B // n_bs

    hs = pl.pallas_call(
        _lstm_recurrence_kernel,
        out_shape=jax.ShapeDtypeStruct((tp, B, H), jnp.float32),
        grid_spec=pltpu.PrefetchScalarGridSpec(
            num_scalar_prefetch=0,
            grid=(n_bs, tp // tc),
            in_specs=[
                pl.BlockSpec((tc, bs, G4), lambda bi, ti: (ti, bi, 0)),  # xg chunk
                pl.BlockSpec((H, G4), lambda bi, ti: (0, 0)),            # W_hh (fetched once)
                pl.BlockSpec((bs, H), lambda bi, ti: (bi, 0)),           # h0 shard
                pl.BlockSpec((bs, H), lambda bi, ti: (bi, 0)),           # c0 shard
            ],
            out_specs=pl.BlockSpec((tc, bs, H), lambda bi, ti: (ti, bi, 0)),
            scratch_shapes=[pltpu.VMEM((bs, H), jnp.float32),            # h carry
                            pltpu.VMEM((bs, H), jnp.float32)],           # c carry
        ),
        compiler_params=pltpu.CompilerParams(
            dimension_semantics=("parallel", "arbitrary"),
            vmem_limit_bytes=32 * 1024 * 1024),
    )(xg, prep["whh_t_bf"], h0.astype(jnp.float32), c0.astype(jnp.float32))
    hs = hs[:Tm1]                                                # (T-1, B, H) f32

    # ---- glue: label logit (f32, wrapper) + row layout + padding ------------
    labels = y_tm[1:].reshape(R)                                 # (R,) t-major
    h_rows_f32 = hs.reshape(R, H)                                # (R, H) f32
    lab_logit = (jnp.sum(h_rows_f32 * prep["wd"][labels], axis=-1)
                 + prep["bd"][labels])                           # (R,) f32

    h_rows = h_rows_f32.astype(jnp.bfloat16)                     # (R, H) bf16
    wd_bf = prep["wd_t_bf"]                                      # (H, V) bf16
    bd = prep["bd"].astype(jnp.float32).reshape(1, V)            # (1, V) f32

    # Clamp tiles to the padded problem size (production defaults tm=tn=512).
    tm_eff = min(tm, pl.cdiv(R, 128) * 128)
    tn_eff = min(tn, pl.cdiv(V, 128) * 128)
    r_pad = pl.cdiv(R, tm_eff) * tm_eff
    v_pad = pl.cdiv(V, tn_eff) * tn_eff
    if r_pad > R:
        h_rows = jnp.pad(h_rows, ((0, r_pad - R), (0, 0)))
    if v_pad > V:
        # Padded vocab columns: zero weights + very negative f32 bias so they
        # do not contribute to the log-sum-exp (bd/logits must stay f32).
        wd_bf = jnp.pad(wd_bf, ((0, 0), (0, v_pad - V)))
        bd = jnp.pad(bd, ((0, 0), (0, v_pad - V)), constant_values=-1e30)

    lse_rows = pl.pallas_call(
        _vocab_lse_kernel,
        out_shape=jax.ShapeDtypeStruct((r_pad, 1), jnp.float32),
        grid_spec=pltpu.PrefetchScalarGridSpec(
            num_scalar_prefetch=0,
            grid=(r_pad // tm_eff, v_pad // tn_eff),
            in_specs=[
                pl.BlockSpec((tm_eff, H), lambda i, j: (i, 0)),   # h rows
                pl.BlockSpec((H, tn_eff), lambda i, j: (0, j)),   # W_d tile (streamed)
                pl.BlockSpec((1, tn_eff), lambda i, j: (0, j)),   # b_d tile
            ],
            out_specs=pl.BlockSpec((tm_eff, 1), lambda i, j: (i, 0)),
            scratch_shapes=[pltpu.VMEM((tm_eff, 1), jnp.float32),  # running max
                            pltpu.VMEM((tm_eff, 1), jnp.float32)], # running sum
        ),
        compiler_params=pltpu.CompilerParams(
            dimension_semantics=("parallel", "arbitrary"),
            vmem_limit_bytes=32 * 1024 * 1024),
    )(h_rows, wd_bf, bd)

    log_prob = (lab_logit - lse_rows[:R, 0]).reshape(Tm1, B).T   # (B, T-1)

    # Length mask (independent of the recurrence; plain XLA).
    mask = (jnp.arange(1, T)[None, :]
            < lens.astype(jnp.int32)[:, None]).astype(jnp.float32)
    return log_prob, mask


# ----------------------------------------------------------------------------
# Parameter init mirroring the PyTorch module (tied=False, init_fg=True).
# ----------------------------------------------------------------------------
def init_params(key, num_word, dim_embed, dim_hidden, init_fg=True):
    ks = jax.random.split(key, 4)
    a_e = math.sqrt(6.0 / (num_word + dim_embed))
    embed = jax.random.uniform(ks[0], (num_word, dim_embed), jnp.float32, -a_e, a_e)
    a_w = math.sqrt(6.0 / (num_word + dim_hidden))
    wd = jax.random.uniform(ks[1], (num_word, dim_hidden), jnp.float32, -a_w, a_w)
    bd = jnp.zeros((num_word,), jnp.float32)
    std = 1.0 / math.sqrt(dim_hidden + dim_embed)
    w_ih = std * jax.random.normal(ks[2], (4 * dim_hidden, dim_embed), jnp.float32)
    w_hh = std * jax.random.normal(ks[3], (4 * dim_hidden, dim_hidden), jnp.float32)
    b_ih = jnp.zeros((4 * dim_hidden,), jnp.float32)
    b_hh = jnp.zeros((4 * dim_hidden,), jnp.float32)
    if init_fg:
        b_ih = b_ih.at[dim_hidden:2 * dim_hidden].set(1.0)
        b_hh = b_hh.at[dim_hidden:2 * dim_hidden].set(1.0)
    return dict(embed=embed, wd=wd, bd=bd, w_ih=w_ih, w_hh=w_hh, b_ih=b_ih, b_hh=b_hh)


# ----------------------------------------------------------------------------
# Pure-JAX f32 reference mirroring PyTorch Decoder.log_prob (drop=False).
# ----------------------------------------------------------------------------
def ref_log_prob(params, y, lens, init_state):
    B, T = y.shape
    H = init_state[0].shape[1]
    y_tm = jnp.transpose(y, (1, 0))                              # (T, B)
    y_embed = params["embed"][y_tm]                              # (T, B, E)
    labels = jnp.transpose(y_tm[1:], (1, 0))                     # (B, T-1)
    h, c = init_state
    lps = []
    for t in range(T - 1):
        x = y_embed[t]
        gates = (x @ params["w_ih"].T + params["b_ih"]
                 + h @ params["w_hh"].T + params["b_hh"])
        i_g = jax.nn.sigmoid(gates[:, 0:H])
        f_g = jax.nn.sigmoid(gates[:, H:2 * H])
        g_g = jnp.tanh(gates[:, 2 * H:3 * H])
        o_g = jax.nn.sigmoid(gates[:, 3 * H:4 * H])
        c = f_g * c + i_g * g_g
        h = o_g * jnp.tanh(c)
        logit = h @ params["wd"].T + params["bd"]
        logsm = jax.nn.log_softmax(logit, axis=-1)
        lps.append(jnp.take_along_axis(logsm, labels[:, t:t + 1], axis=1)[:, 0])
    log_prob = jnp.stack(lps, axis=1)                            # (B, T-1)
    mask = (jnp.arange(T)[None, 1:] < lens[:, None]).astype(jnp.float32)
    return log_prob, mask


if __name__ == "__main__":
    B, T = 8, 20
    NUM_WORD, DIM_EMBED, DIM_HIDDEN = 500, 64, 128   # V=500 exercises vocab padding

    key = jax.random.PRNGKey(0)
    k_par, k_y, k_len, k_h, k_c = jax.random.split(key, 5)
    params = init_params(k_par, NUM_WORD, DIM_EMBED, DIM_HIDDEN, init_fg=True)
    prep = prepare_decoder_params(params)

    y = jax.random.randint(k_y, (B, T), 0, NUM_WORD, dtype=jnp.int32)
    lens = jax.random.randint(k_len, (B,), 2, T + 1, dtype=jnp.int32)
    h0 = jax.random.normal(k_h, (B, DIM_HIDDEN), jnp.float32)
    c0 = jax.random.normal(k_c, (B, DIM_HIDDEN), jnp.float32)

    log_prob, mask = decoder_log_prob(prep, y, lens, (h0, c0))
    jax.block_until_ready((log_prob, mask))

    ref_lp, ref_mask = ref_log_prob(params, y, lens, (h0, c0))
    # bf16 matmul operands with f32 accumulation -> small differences against
    # the pure-f32 reference are expected.
    np.testing.assert_allclose(np.asarray(log_prob), np.asarray(ref_lp),
                               rtol=5e-2, atol=5e-2)
    np.testing.assert_allclose(np.asarray(mask), np.asarray(ref_mask))

    print("KERNEL_OK")
</pallas_src>

<mosaic_0001>
module attributes {stable_mosaic.version = 11 : i64} {
  func.func @_lstm_recurrence_kernel(%arg0: i32, %arg1: i32, %arg2: memref<16x8x512xbf16, #tpu.memory_space<vmem>>, %arg3: memref<128x512xbf16, #tpu.memory_space<vmem>>, %arg4: memref<8x128xf32, #tpu.memory_space<vmem>>, %arg5: memref<8x128xf32, #tpu.memory_space<vmem>>, %arg6: memref<16x8x128xf32, #tpu.memory_space<vmem>>, %arg7: memref<8x128xf32, #tpu.memory_space<vmem>>, %arg8: memref<8x128xf32, #tpu.memory_space<vmem>>) attributes {dimension_semantics = [#tpu.dimension_semantics<parallel>, #tpu.dimension_semantics<arbitrary>], iteration_bounds = array<i64: 1, 2>, scalar_prefetch = 0 : i64, scratch_operands = 2 : i64, tpu.core_type = #tpu.core_type<tc>, window_params = [{transform_indices = @transform_0, window_bounds = array<i64: 16, 8, 512>}, {pipeline_mode = #tpu.pipeline_mode<synchronous>, transform_indices = @transform_1, window_bounds = array<i64: 128, 512>}, {transform_indices = @transform_2, window_bounds = array<i64: 8, 128>}, {transform_indices = @transform_3, window_bounds = array<i64: 8, 128>}, {transform_indices = @transform_4, window_bounds = array<i64: 16, 8, 128>}]} {
    %c0_i32 = arith.constant 0 : i32
    %0 = arith.cmpi eq, %arg1, %c0_i32 : i32
    %1 = arith.extui %0 : i1 to i32
    %c0_i32_0 = arith.constant 0 : i32
    %2 = arith.cmpi ne, %1, %c0_i32_0 : i32
    scf.if %2 {
      %c0_12 = arith.constant 0 : index
      %c0_13 = arith.constant 0 : index
      %10 = vector.load %arg4[%c0_12, %c0_13] : memref<8x128xf32, #tpu.memory_space<vmem>>, vector<8x128xf32>
      %c0_14 = arith.constant 0 : index
      %c0_15 = arith.constant 0 : index
      %11 = vector.load %arg7[%c0_14, %c0_15] : memref<8x128xf32, #tpu.memory_space<vmem>>, vector<8x128xf32>
      tpu.vector_store %arg7[%c0_14, %c0_15], %10 {strides = array<i32>} : memref<8x128xf32, #tpu.memory_space<vmem>>, vector<8x128xf32>,
      %c0_16 = arith.constant 0 : index
      %c0_17 = arith.constant 0 : index
      %12 = vector.load %arg5[%c0_16, %c0_17] : memref<8x128xf32, #tpu.memory_space<vmem>>, vector<8x128xf32>
      %c0_18 = arith.constant 0 : index
      %c0_19 = arith.constant 0 : index
      %13 = vector.load %arg8[%c0_18, %c0_19] : memref<8x128xf32, #tpu.memory_space<vmem>>, vector<8x128xf32>
      tpu.vector_store %arg8[%c0_18, %c0_19], %12 {strides = array<i32>} : memref<8x128xf32, #tpu.memory_space<vmem>>, vector<8x128xf32>,
    } else {
    }
    %c0 = arith.constant 0 : index
    %c0_1 = arith.constant 0 : index
    %3 = vector.load %arg3[%c0, %c0_1] : memref<128x512xbf16, #tpu.memory_space<vmem>>, vector<128x512xbf16>
    %c0_2 = arith.constant 0 : index
    %c0_3 = arith.constant 0 : index
    %4 = vector.load %arg7[%c0_2, %c0_3] : memref<8x128xf32, #tpu.memory_space<vmem>>, vector<8x128xf32>
    %c0_4 = arith.constant 0 : index
    %c0_5 = arith.constant 0 : index
    %5 = vector.load %arg8[%c0_4, %c0_5] : memref<8x128xf32, #tpu.memory_space<vmem>>, vector<8x128xf32>
    %c0_i32_6 = arith.constant 0 : i32
    %c16_i32 = arith.constant 16 : i32
    %6 = arith.addi %c0_i32_6, %c16_i32 : i32
    %c1_i32 = arith.constant 1 : i32
    %7:2 = scf.for %arg9 = %c0_i32_6 to %6 step %c1_i32 iter_args(%arg10 = %4, %arg11 = %5) -> (vector<8x128xf32>, vector<8x128xf32>)  : i32 {
      %10 = arith.index_cast %arg9 : i32 to index
      %c0_12 = arith.constant 0 : index
      %c0_13 = arith.constant 0 : index
      %11 = vector.load %arg2[%10, %c0_12, %c0_13] : memref<16x8x512xbf16, #tpu.memory_space<vmem>>, vector<1x8x512xbf16>
      %12 = vector.shape_cast %11 : vector<1x8x512xbf16> to vector<8x512xbf16>
      %13 = arith.extf %12 : vector<8x512xbf16> to vector<8x512xf32>
      %14 = arith.truncf %arg10 : vector<8x128xf32> to vector<8x128xbf16>
      %cst = arith.constant dense<0.000000e+00> : vector<8x512xf32>
      %15 = tpu.matmul %14, %3, %cst {dimension_numbers = #tpu.dot_dimension_numbers<[1], [0], [0], [1], [0, 0, 1, 1], [], []>} : vector<8x128xbf16>, vector<128x512xbf16>, vector<8x512xf32> -> vector<8x512xf32>
      %16 = arith.addf %13, %15 : vector<8x512xf32>
      %17 = vector.extract_strided_slice %16 {offsets = [0, 0], sizes = [8, 128], strides = [1, 1]} : vector<8x512xf32> to vector<8x128xf32>
      %18 = arith.negf %17 : vector<8x128xf32>
      %19 = math.exp %18 : vector<8x128xf32>
      %cst_14 = arith.constant 1.000000e+00 : f32
      %20 = vector.broadcast %cst_14 : f32 to vector<8x128xf32>
      %21 = arith.addf %20, %19 : vector<8x128xf32>
      %22 = arith.divf %20, %21 : vector<8x128xf32>
      %23 = vector.extract_strided_slice %16 {offsets = [0, 128], sizes = [8, 128], strides = [1, 1]} : vector<8x512xf32> to vector<8x128xf32>
      %24 = arith.negf %23 : vector<8x128xf32>
      %25 = math.exp %24 : vector<8x128xf32>
      %cst_15 = arith.constant 1.000000e+00 : f32
      %26 = vector.broadcast %cst_15 : f32 to vector<8x128xf32>
      %27 = arith.addf %26, %25 : vector<8x128xf32>
      %28 = arith.divf %26, %27 : vector<8x128xf32>
      %29 = vector.extract_strided_slice %16 {offsets = [0, 256], sizes = [8, 128], strides = [1, 1]} : vector<8x512xf32> to vector<8x128xf32>
      %30 = math.tanh %29 : vector<8x128xf32>
      %31 = vector.extract_strided_slice %16 {offsets = [0, 384], sizes = [8, 128], strides = [1, 1]} : vector<8x512xf32> to vector<8x128xf32>
      %32 = arith.negf %31 : vector<8x128xf32>
      %33 = math.exp %32 : vector<8x128xf32>
      %cst_16 = arith.constant 1.000000e+00 : f32
      %34 = vector.broadcast %cst_16 : f32 to vector<8x128xf32>
      %35 = arith.addf %34, %33 : vector<8x128xf32>
      %36 = arith.divf %34, %35 : vector<8x128xf32>
      %37 = arith.mulf %28, %arg11 : vector<8x128xf32>
      %38 = arith.mulf %22, %30 : vector<8x128xf32>
      %39 = arith.addf %37, %38 : vector<8x128xf32>
      %40 = math.tanh %39 : vector<8x128xf32>
      %41 = arith.mulf %36, %40 : vector<8x128xf32>
      %42 = arith.index_cast %arg9 : i32 to index
      %c0_17 = arith.constant 0 : index
      %c0_18 = arith.constant 0 : index
      %43 = vector.load %arg6[%42, %c0_17, %c0_18] : memref<16x8x128xf32, #tpu.memory_space<vmem>>, vector<1x8x128xf32>
      %44 = vector.shape_cast %43 : vector<1x8x128xf32> to vector<8x128xf32>
      %45 = vector.shape_cast %41 : vector<8x128xf32> to vector<1x8x128xf32>
      tpu.vector_store %arg6[%42, %c0_17, %c0_18], %45 {strides = array<i32>} : memref<16x8x128xf32, #tpu.memory_space<vmem>>, vector<1x8x128xf32>,
      scf.yield %41, %39 : vector<8x128xf32>, vector<8x128xf32>
    }
    %c16_i32_7 = arith.constant 16 : i32
    %c0_8 = arith.constant 0 : index
    %c0_9 = arith.constant 0 : index
    %8 = vector.load %arg7[%c0_8, %c0_9] : memref<8x128xf32, #tpu.memory_space<vmem>>, vector<8x128xf32>
    tpu.vector_store %arg7[%c0_8, %c0_9], %7#0 {strides = array<i32>} : memref<8x128xf32, #tpu.memory_space<vmem>>, vector<8x128xf32>,
    %c0_10 = arith.constant 0 : index
    %c0_11 = arith.constant 0 : index
    %9 = vector.load %arg8[%c0_10, %c0_11] : memref<8x128xf32, #tpu.memory_space<vmem>>, vector<8x128xf32>
    tpu.vector_store %arg8[%c0_10, %c0_11], %7#1 {strides = array<i32>} : memref<8x128xf32, #tpu.memory_space<vmem>>, vector<8x128xf32>,
    return
  }
  func.func @transform_0(%arg0: i32, %arg1: i32) -> (i32, i32, i32) {
    %c0_i32 = arith.constant 0 : i32
    %c0_i32_0 = arith.constant 0 : i32
    return %arg1, %arg0, %c0_i32 : i32, i32, i32
  }
  func.func @transform_1(%arg0: i32, %arg1: i32) -> (i32, i32) {
    %c0_i32 = arith.constant 0 : i32
    %c0_i32_0 = arith.constant 0 : i32
    %c0_i32_1 = arith.constant 0 : i32
    return %c0_i32, %c0_i32_0 : i32, i32
  }
  func.func @transform_2(%arg0: i32, %arg1: i32) -> (i32, i32) {
    %c0_i32 = arith.constant 0 : i32
    %c0_i32_0 = arith.constant 0 : i32
    return %arg0, %c0_i32 : i32, i32
  }
  func.func @transform_3(%arg0: i32, %arg1: i32) -> (i32, i32) {
    %c0_i32 = arith.constant 0 : i32
    %c0_i32_0 = arith.constant 0 : i32
    return %arg0, %c0_i32 : i32, i32
  }
  func.func @transform_4(%arg0: i32, %arg1: i32) -> (i32, i32, i32) {
    %c0_i32 = arith.constant 0 : i32
    %c0_i32_0 = arith.constant 0 : i32
    return %arg1, %arg0, %c0_i32 : i32, i32, i32
  }
}

</mosaic_0001>

<llo_original>
// kernel: tpu_custom_call.1
$region0: #{tpu_custom_call.1}
  #allocation0 [shape = 'u32[]', space=smem, size = 0x4, offset = 0x4, fixed_abs, tag = 'smem constant byte address 0x4 - core index']
  #allocation1 [shape = 'u32[72,128]{1,0:T(1,128)}', space=vmem, size = 0x9000, scoped, tag = 'internal scratch']
  #allocation2 [shape = 'f32[8,128]{1,0:T(8,128)}', space=vmem, size = 0x1000, scoped, tag = 'scratch operand']
  #allocation3 [shape = 'f32[8,128]{1,0:T(8,128)}', space=vmem, size = 0x1000, scoped, tag = 'scratch operand']
  %s0 = inlined_call_operand.hbm [shape: bf16[32,8,512], index: 0, kind: input, shape index: {}]
  %s1 = inlined_call_operand.hbm [shape: bf16[128,512], index: 1, kind: input, shape index: {}]
  %s2 = inlined_call_operand.hbm [shape: f32[8,128], index: 2, kind: input, shape index: {}]
  %s3 = inlined_call_operand.hbm [shape: f32[8,128], index: 3, kind: input, shape index: {}]
  %s4 = inlined_call_operand.hbm [shape: f32[32,8,128], index: 4, kind: output, shape index: {}]
  %s5 = sld [smem:[#allocation0]]
  $region76: #{tpu_custom_call.1} parent=0
    _
  %s7 = ssub.s32 1, %s5
  %s8 = scalar_select 0, %s7, %s5
  $region1: #{tpu_custom_call.1} parent=0
    #allocation4 [shape = 'u8[262144]{0}', space=vmem, size = 0x40000, scoped, tag = 'input window, operand 0']
    #allocation5 [shape = 's32[2]{0}', space=sflag, size = 0x8, scoped, tag = 'scoped memory for tpu_custom_call.1']
    #allocation6 [shape = 's32[2]{0}', space=sflag, size = 0x8, scoped, tag = 'scoped memory for tpu_custom_call.1']
    #allocation7 [shape = 'u8[131072]{0}', space=vmem, size = 0x20000, scoped, tag = 'input window, operand 1, single buffered']
    #allocation8 [shape = 's32[1]{0}', space=sflag, size = 0x4, scoped, tag = 'scoped memory for tpu_custom_call.1']
    #allocation9 [shape = 'u8[4096]{0}', space=vmem, size = 0x1000, scoped, tag = 'input window, operand 2, single buffered']
    #allocation10 [shape = 'u8[4096]{0}', space=vmem, size = 0x1000, scoped, tag = 'input window, operand 3, single buffered']
    #allocation11 [shape = 's32[1]{0}', space=sflag, size = 0x4, scoped, tag = 'scoped memory for tpu_custom_call.1']
    #allocation12 [shape = 'u8[131072]{0}', space=vmem, size = 0x20000, scoped, tag = 'output window, operand 0']
    %9 = vsyncpa [#allocation5], 0
    %s10 = scalar_lea.sflag [#allocation5], 1
    %11 = vsyncpa %s10, 0
    %12 = vsyncpa [#allocation8], 0
    %13 = vsyncpa [#allocation11], 0
    %14 = vsyncpa [#allocation6], 0
    %s15 = scalar_lea.sflag [#allocation6], 1
    %16 = vsyncpa %s15, 0
    loop: start=0, step=1, limit=4
    $region2: #{tpu_custom_call.1} parent=1 // loop_pre_header
      _
    $region3: #{tpu_custom_call.1} parent=1 // loop_header
      %s18 = sphi 0, %s22
      %p19 = scmp.ge.s32.totalorder %s18, 4
      %s25 = sphi 0, %s37
      %s26 = sphi 0, %s33
      %s27 = sphi 0, %s25
      %s28 = sphi 0, %s26
      %s29 = sphi 0, %s27
      %s30 = sphi 0, %s28
      %s42 = sphi 0, %s44
      %s45 = sphi 0, %s42
      %s46 = sphi 0, %s45
      %s62 = sphi 0, %s46
      %s66 = sphi 0, %s66
      %s68 = sphi 0, %s66
      %s69 = sphi 0, %s68
      %s83 = sphi 0, %s69
      %s89 = sphi 0, %s91
      %s92 = sphi 0, %s89
      %s93 = sphi 0, %s92
      %s109 = sphi 0, %s93
      %s115 = sphi 0, %s117
      %s118 = sphi 0, %s115
      %s119 = sphi 0, %s118
      %s135 = sphi 0, %s119
      %s143 = sphi 0, %s145
      %s146 = sphi 0, %s143
      %s147 = sphi 0, %s146
      %s163 = sphi 0, %s147
    $region4: #{tpu_custom_call.1} parent=1 // loop_header_branch
      %21 = sbr.rel (%p19) target = $region8
    $region5: #{tpu_custom_call.1} parent=1 // loop_body
      %s23 = ssub.s32 %s18, 1
      %s24 = ssub.s32 %s18, 2
      %s31 = sadd.s32 1, %s26
      %p32 = scmp.ge.s32.totalorder %s31, 2
      %s33 = scalar_select %p32, 0, %s31
      %s34 = sadd.s32 1, %s25
      %s35 = scalar_select %p32, %s34, %s25
      %p36 = scmp.ge.s32.totalorder %s35, 1
      %s37 = scalar_select %p36, 0, %s35
      %s38 = ssub.s32 %s26, %s33
      %s39 = ssub.s32 %s25, %s37
      %s40 = sor.u32 %s38, %s39
      %p41 = scmp.eq.s32.totalorder %s40, 0
      %s43 = sadd.s32 %s42, 1
      %s44 = scalar_select %p41, %s42, %s43
      %p47 = pneg %p41
      %p48 = scmp.eq.s32.totalorder %s18, 1
      %p49 = por %p47, %p48
      %p50 = scmp.ne.s32.totalorder %s42, %s45
      %p51 = scmp.eq.s32.totalorder %s18, 0
      %p52 = por %p50, %p51
      %p53 = scmp.ne.s32.totalorder %s42, %s45
      %p54 = scmp.eq.s32.totalorder %s23, 1
      %p55 = por %p53, %p54
      %p56 = scmp.ne.s32.totalorder %s45, %s46
      %p57 = scmp.eq.s32.totalorder %s23, 0
      %p58 = por %p56, %p57
      %p59 = scmp.ne.s32.totalorder %s45, %s46
      %p60 = scmp.eq.s32.totalorder %s24, 1
      %p61 = por %p59, %p60
      %p63 = scmp.ne.s32.totalorder %s46, %s62
      %p64 = scmp.eq.s32.totalorder %s24, 0
      %p65 = por %p63, %p64
      %s67 = sadd.s32 %s66, 1
      %p70 = scmp.eq.s32.totalorder %s18, 1
      %p71 = scmp.ne.s32.totalorder %s66, %s68
      %p72 = scmp.eq.s32.totalorder %s18, 0
      %p73 = por %p71, %p72
      %p74 = scmp.ne.s32.totalorder %s66, %s68
      %p75 = scmp.eq.s32.totalorder %s23, 1
      %p76 = por %p74, %p75
      %p77 = scmp.ne.s32.totalorder %s68, %s69
      %p78 = scmp.eq.s32.totalorder %s23, 0
      %p79 = por %p77, %p78
      %p80 = scmp.ne.s32.totalorder %s68, %s69
      %p81 = scmp.eq.s32.totalorder %s24, 1
      %p82 = por %p80, %p81
      %p84 = scmp.ne.s32.totalorder %s69, %s83
      %p85 = scmp.eq.s32.totalorder %s24, 0
      %p86 = por %p84, %p85
      %s87 = ssub.s32 %s25, %s37
      %p88 = scmp.eq.s32.totalorder %s87, 0
      %s90 = sadd.s32 %s89, 1
      %s91 = scalar_select %p88, %s89, %s90
      %p94 = pneg %p88
      %p95 = scmp.eq.s32.totalorder %s18, 1
      %p96 = por %p94, %p95
      %p97 = scmp.ne.s32.totalorder %s89, %s92
      %p98 = scmp.eq.s32.totalorder %s18, 0
      %p99 = por %p97, %p98
      %p100 = scmp.ne.s32.totalorder %s89, %s92
      %p101 = scmp.eq.s32.totalorder %s23, 1
      %p102 = por %p100, %p101
      %p103 = scmp.ne.s32.totalorder %s92, %s93
      %p104 = scmp.eq.s32.totalorder %s23, 0
      %p105 = por %p103, %p104
      %p106 = scmp.ne.s32.totalorder %s92, %s93
      %p107 = scmp.eq.s32.totalorder %s24, 1
      %p108 = por %p106, %p107
      %p110 = scmp.ne.s32.totalorder %s93, %s109
      %p111 = scmp.eq.s32.totalorder %s24, 0
      %p112 = por %p110, %p111
      %s113 = ssub.s32 %s25, %s37
      %p114 = scmp.eq.s32.totalorder %s113, 0
      %s116 = sadd.s32 %s115, 1
      %s117 = scalar_select %p114, %s115, %s116
      %p120 = pneg %p114
      %p121 = scmp.eq.s32.totalorder %s18, 1
      %p122 = por %p120, %p121
      %p123 = scmp.ne.s32.totalorder %s115, %s118
      %p124 = scmp.eq.s32.totalorder %s18, 0
      %p125 = por %p123, %p124
      %p126 = scmp.ne.s32.totalorder %s115, %s118
      %p127 = scmp.eq.s32.totalorder %s23, 1
      %p128 = por %p126, %p127
      %p129 = scmp.ne.s32.totalorder %s118, %s119
      %p130 = scmp.eq.s32.totalorder %s23, 0
      %p131 = por %p129, %p130
      %p132 = scmp.ne.s32.totalorder %s118, %s119
      %p133 = scmp.eq.s32.totalorder %s24, 1
      %p134 = por %p132, %p133
      %p136 = scmp.ne.s32.totalorder %s119, %s135
      %p137 = scmp.eq.s32.totalorder %s24, 0
      %p138 = por %p136, %p137
      %s139 = ssub.s32 %s26, %s33
      %s140 = ssub.s32 %s25, %s37
      %s141 = sor.u32 %s139, %s140
      %p142 = scmp.eq.s32.totalorder %s141, 0
      %s144 = sadd.s32 %s143, 1
      %s145 = scalar_select %p142, %s143, %s144
      %p148 = pneg %p142
      %p149 = scmp.eq.s32.totalorder %s18, 1
      %p150 = por %p148, %p149
      %p151 = scmp.ne.s32.totalorder %s143, %s146
      %p152 = scmp.eq.s32.totalorder %s18, 0
      %p153 = por %p151, %p152
      %p154 = scmp.ne.s32.totalorder %s143, %s146
      %p155 = scmp.eq.s32.totalorder %s23, 1
      %p156 = por %p154, %p155
      %p157 = scmp.ne.s32.totalorder %s146, %s147
      %p158 = scmp.eq.s32.totalorder %s23, 0
      %p159 = por %p157, %p158
      %p160 = scmp.ne.s32.totalorder %s146, %s147
      %p161 = scmp.eq.s32.totalorder %s24, 1
      %p162 = por %p160, %p161
      %p164 = scmp.ne.s32.totalorder %s147, %s163
      %p165 = scmp.eq.s32.totalorder %s24, 0
      %p166 = por %p164, %p165
      %p167 = scmp.le.s32.totalorder 1, %s18
      %p168 = scmp.lt.s32.totalorder %s18, 3
      %p169 = pnand %p167, %p168
      %p170 = pneg %p169
      // Predicated region
      $region9: #{tpu_custom_call.1} parent=5 // pred_check
        _
      $region10: #{tpu_custom_call.1} parent=5 // pred_check_branch
        %172 = sbr.rel (%p169) target = $region12
      $region11: #{tpu_custom_call.1} parent=5 // pred_region
        %s173 = ssub.s32 %s18, 1
        // Predicated region
        $region13: #{tpu_custom_call.1} parent=11 // pred_check
          %p174 = pneg %p79
        $region14: #{tpu_custom_call.1} parent=11 // pred_check_branch
          %176 = sbr.rel (%p174) target = $region16
        $region15: #{tpu_custom_call.1} parent=11 // pred_region
          %178 = vsyncadd [#allocation8], 0
          %s179 = sshll.u32 %s1, 4
          %s180 = int_to_ptr.hbm [resolvable:$true] %s179
          %s181 = sshll.u32 [#allocation7], 4
          %s182 = int_to_ptr.vmem [resolvable:$true] %s181
          %187 = dma.hbm_to_vmem [thread:$0]  %s180, 4096, %s182, [#allocation8], 256, 256, 16
        $region16: #{tpu_custom_call.1} parent=11 // pred_fallthru
          _
        // Predicated region
        $region17: #{tpu_custom_call.1} parent=11 // pred_check
          %p188 = pneg %p105
        $region18: #{tpu_custom_call.1} parent=11 // pred_check_branch
          %190 = sbr.rel (%p188) target = $region20
        $region19: #{tpu_custom_call.1} parent=11 // pred_region
          %192 = vsyncadd [#allocation8], 0
          %s193 = smul.addr %s27, 8
          %s194 = scalar_lea.hbm %s2, %s193
          %s196 = sshll.u32 %s194, 4
          %s197 = int_to_ptr.hbm [resolvable:$true] %s196
          %s198 = sshll.u32 [#allocation9], 4
          %s199 = int_to_ptr.vmem [resolvable:$true] %s198
          %201 = dma.hbm_to_vmem [thread:$0]  %s197, 128, %s199, [#allocation8]
        $region20: #{tpu_custom_call.1} parent=11 // pred_fallthru
          _
        // Predicated region
        $region21: #{tpu_custom_call.1} parent=11 // pred_check
          %p202 = pneg %p131
        $region22: #{tpu_custom_call.1} parent=11 // pred_check_branch
          %204 = sbr.rel (%p202) target = $region24
        $region23: #{tpu_custom_call.1} parent=11 // pred_region
          %206 = vsyncadd [#allocation11], 0
          %s207 = smul.addr %s27, 8
          %s208 = scalar_lea.hbm %s3, %s207
          %s210 = sshll.u32 %s208, 4
          %s211 = int_to_ptr.hbm [resolvable:$true] %s210
          %s212 = sshll.u32 [#allocation10], 4
          %s213 = int_to_ptr.vmem [resolvable:$true] %s212
          %215 = dma.hbm_to_vmem [thread:$0]  %s211, 128, %s213, [#allocation11]
        $region24: #{tpu_custom_call.1} parent=11 // pred_fallthru
          _
      $region12: #{tpu_custom_call.1} parent=5 // pred_fallthru
        _
      %p216 = scmp.lt.s32.totalorder %s18, 2
      // Predicated region
      $region25: #{tpu_custom_call.1} parent=5 // pred_check
        %p217 = pneg %p216
      $region26: #{tpu_custom_call.1} parent=5 // pred_check_branch
        %219 = sbr.rel (%p217) target = $region28
      $region27: #{tpu_custom_call.1} parent=5 // pred_region
        // Predicated region
        $region29: #{tpu_custom_call.1} parent=27 // pred_check
          %p220 = pneg %p52
        $region30: #{tpu_custom_call.1} parent=27 // pred_check_branch
          %222 = sbr.rel (%p220) target = $region32
        $region31: #{tpu_custom_call.1} parent=27 // pred_region
          %s223 = sand.u32 %s42, 1
          %s224 = scalar_lea.sflag [#allocation5], %s223
          %s225 = sand.u32 %s42, 1
          %s226 = smul.addr %s225, 256
          %s227 = scalar_lea.vmem [#allocation4], %s226
          %s228 = smul.u32 16, %s26
          %230 = vsyncadd %s224, 0
          %s231 = smul.addr %s25, 4
          %s232 = smul.addr %s228, 4
          %s233 = sadd.s32 %s231, %s232
          %s234 = smul.addr %s233, 4
          %s235 = scalar_lea.hbm %s0, %s234
          %s236 = sshll.u32 %s235, 4
          %s237 = int_to_ptr.hbm [resolvable:$true] %s236
          %s238 = sshll.u32 %s227, 4
          %s239 = int_to_ptr.vmem [resolvable:$true] %s238
          %244 = dma.hbm_to_vmem [thread:$0]  %s237, 4096, %s239, %s224, 256, 256, 16
        $region32: #{tpu_custom_call.1} parent=27 // pred_fallthru
          _
      $region28: #{tpu_custom_call.1} parent=5 // pred_fallthru
        _
      %p245 = scmp.le.s32.totalorder 1, %s18
      %p246 = scmp.lt.s32.totalorder %s18, 3
      %p247 = pnand %p245, %p246
      %p248 = pneg %p247
      // Predicated region
      $region33: #{tpu_custom_call.1} parent=5 // pred_check
        _
      $region34: #{tpu_custom_call.1} parent=5 // pred_check_branch
        %250 = sbr.rel (%p247) target = $region36
      $region35: #{tpu_custom_call.1} parent=5 // pred_region
        %s251 = ssub.s32 %s18, 1
        %s252 = sand.u32 %s45, 1
        %s253 = scalar_lea.sflag [#allocation5], %s252
        %s254 = sand.u32 %s45, 1
        %s255 = smul.addr %s254, 256
        %s256 = scalar_lea.vmem [#allocation4], %s255
        // Predicated region
        $region37: #{tpu_custom_call.1} parent=35 // pred_check
          %p257 = pneg %p58
        $region38: #{tpu_custom_call.1} parent=35 // pred_check_branch
          %259 = sbr.rel (%p257) target = $region40
        $region39: #{tpu_custom_call.1} parent=35 // pred_region
          %261 = dma.done %s253, 4096
        $region40: #{tpu_custom_call.1} parent=35 // pred_fallthru
          _
        // Predicated region
        $region41: #{tpu_custom_call.1} parent=35 // pred_check
          %p262 = pneg %p79
        $region42: #{tpu_custom_call.1} parent=35 // pred_check_branch
          %264 = sbr.rel (%p262) target = $region44
        $region43: #{tpu_custom_call.1} parent=35 // pred_region
          %266 = dma.done [#allocation8], 4096
        $region44: #{tpu_custom_call.1} parent=35 // pred_fallthru
          _
        // Predicated region
        $region45: #{tpu_custom_call.1} parent=35 // pred_check
          %p267 = pneg %p105
        $region46: #{tpu_custom_call.1} parent=35 // pred_check_branch
          %269 = sbr.rel (%p267) target = $region48
        $region47: #{tpu_custom_call.1} parent=35 // pred_region
          %271 = dma.done [#allocation8], 128
        $region48: #{tpu_custom_call.1} parent=35 // pred_fallthru
          _
        // Predicated region
        $region49: #{tpu_custom_call.1} parent=35 // pred_check
          %p272 = pneg %p131
        $region50: #{tpu_custom_call.1} parent=35 // pred_check_branch
          %274 = sbr.rel (%p272) target = $region52
        $region51: #{tpu_custom_call.1} parent=35 // pred_region
          %276 = dma.done [#allocation11], 128
        $region52: #{tpu_custom_call.1} parent=35 // pred_fallthru
          _
        %s277 = sand.u32 %s45, 1
        %s278 = scalar_lea.sflag [#allocation5], %s277
        %s279 = sand.u32 %s45, 1
        %s280 = smul.addr %s279, 256
        %s281 = scalar_lea.vmem [#allocation4], %s280
        %p282 = pneg %p58
        %p283 = pneg %p55
        %p284 = pneg %p79
        %p285 = pneg %p76
        %p286 = pneg %p105
        %p287 = pneg %p102
        %p288 = pneg %p131
        %p289 = pneg %p128
        %p290 = pneg %p159
        %p291 = pneg %p156
        %s292 = sand.u32 %s146, 1
        %s293 = scalar_lea.sflag [#allocation6], %s292
        %s294 = sand.u32 %s146, 1
        %s295 = smul.addr %s294, 128
        %s296 = scalar_lea.vmem [#allocation12], %s295
        %s297 = smul.u32 16, %s28
        %s298 = smul.u32 16, %s28
        %p299 = scmp.eq.s32.totalorder %s28, 0
        // Predicated region
        $region53: #{tpu_custom_call.1} parent=35 // pred_check
          %p300 = pneg %p299
        $region54: #{tpu_custom_call.1} parent=35 // pred_check_branch
          %302 = sbr.rel (%p300) target = $region56
        $region55: #{tpu_custom_call.1} parent=35 // pred_region
          %v303 = vld [vmem:[#allocation9] sm:$0xff]
          %304 = vst [vmem:[#allocation2] sm:$0xff] %v303
          %v305 = vld [vmem:[#allocation10] sm:$0xff]
          %306 = vst [vmem:[#allocation3] sm:$0xff] %v305
        $region56: #{tpu_custom_call.1} parent=35 // pred_fallthru
          _
        %v307 = vld [vmem:[#allocation7] sm:$0xff]
        %v308 = vld [vmem:[#allocation7 + $0x8] sm:$0xff]
        %v309 = vld [vmem:[#allocation7 + $0x10] sm:$0xff]
        %v310 = vld [vmem:[#allocation7 + $0x18] sm:$0xff]
        %v311 = vld [vmem:[#allocation7 + $0x20] sm:$0xff]
        %v312 = vld [vmem:[#allocation7 + $0x28] sm:$0xff]
        %v313 = vld [vmem:[#allocation7 + $0x30] sm:$0xff]
        %v314 = vld [vmem:[#allocation7 + $0x38] sm:$0xff]
        %v315 = vld [vmem:[#allocation7 + $0x40] sm:$0xff]
        %v316 = vld [vmem:[#allocation7 + $0x48] sm:$0xff]
        %v317 = vld [vmem:[#allocation7 + $0x50] sm:$0xff]
        %v318 = vld [vmem:[#allocation7 + $0x58] sm:$0xff]
        %v319 = vld [vmem:[#allocation7 + $0x60] sm:$0xff]
        %v320 = vld [vmem:[#allocation7 + $0x68] sm:$0xff]
        %v321 = vld [vmem:[#allocation7 + $0x70] sm:$0xff]
        %v322 = vld [vmem:[#allocation7 + $0x78] sm:$0xff]
        %v323 = vld [vmem:[#allocation7 + $0x80] sm:$0xff]
        %v324 = vld [vmem:[#allocation7 + $0x88] sm:$0xff]
        %v325 = vld [vmem:[#allocation7 + $0x90] sm:$0xff]
        %v326 = vld [vmem:[#allocation7 + $0x98] sm:$0xff]
        %v327 = vld [vmem:[#allocation7 + $0xa0] sm:$0xff]
        %v328 = vld [vmem:[#allocation7 + $0xa8] sm:$0xff]
        %v329 = vld [vmem:[#allocation7 + $0xb0] sm:$0xff]
        %v330 = vld [vmem:[#allocation7 + $0xb8] sm:$0xff]
        %v331 = vld [vmem:[#allocation7 + $0xc0] sm:$0xff]
        %v332 = vld [vmem:[#allocation7 + $0xc8] sm:$0xff]
        %v333 = vld [vmem:[#allocation7 + $0xd0] sm:$0xff]
        %v334 = vld [vmem:[#allocation7 + $0xd8] sm:$0xff]
        %v335 = vld [vmem:[#allocation7 + $0xe0] sm:$0xff]
        %v336 = vld [vmem:[#allocation7 + $0xe8] sm:$0xff]
        %v337 = vld [vmem:[#allocation7 + $0xf0] sm:$0xff]
        %v338 = vld [vmem:[#allocation7 + $0xf8] sm:$0xff]
        %v339 = vld [vmem:[#allocation2] sm:$0xff]
        %v340 = vld [vmem:[#allocation3] sm:$0xff]
        loop: start=0, step=1, limit=16
        $region57: #{tpu_custom_call.1} parent=35 // loop_pre_header
          _
        $region58: #{tpu_custom_call.1} parent=35 // loop_header
          %s342 = sphi 0, %s346
          %p343 = scmp.ge.s32.totalorder %s342, 16
          %v347 = vphi %v339, %v637
          %v348 = vphi %v340, %v635
        $region59: #{tpu_custom_call.1} parent=35 // loop_header_branch
          %345 = sbr.rel (%p343) target = $region63
        $region60: #{tpu_custom_call.1} parent=35 // loop_body
          %s349 = smul.u32 %s342, 4
          %s350 = smul.addr %s349, 4
          %s351 = scalar_lea.vmem %s256, %s350 [#allocation4]
          %v352 = vld [vmem:[%s351] sm:$0xff]
          %v353 = vld [vmem:[%s351 + $0x8] sm:$0xff]
          %v354 = vunpack.c.l.bf16 %v352
          %v355 = vunpack.c.h.bf16 %v352
          %v356 = vunpack.c.l.bf16 %v353
          %v357 = vunpack.c.h.bf16 %v353
          %v358 = vpack.c.bf16 %v347, %v347
          %v391 = vunpack.c.l.b16 %v307
          %v392 = vunpack.c.h.b16 %v307
          %v393 = vunpack.c.l.b16 %v308
          %v394 = vunpack.c.h.b16 %v308
          %v395 = vunpack.c.l.b16 %v309
          %v396 = vunpack.c.h.b16 %v309
          %v397 = vunpack.c.l.b16 %v310
          %v398 = vunpack.c.h.b16 %v310
          %v399 = vunpack.c.l.b16 %v311
          %v400 = vunpack.c.h.b16 %v311
          %v401 = vunpack.c.l.b16 %v312
          %v402 = vunpack.c.h.b16 %v312
          %v403 = vunpack.c.l.b16 %v313
          %v404 = vunpack.c.h.b16 %v313
          %v405 = vunpack.c.l.b16 %v314
          %v406 = vunpack.c.h.b16 %v314
          %v407 = vunpack.c.l.b16 %v315
          %v408 = vunpack.c.h.b16 %v315
          %v409 = vunpack.c.l.b16 %v316
          %v410 = vunpack.c.h.b16 %v316
          %v411 = vunpack.c.l.b16 %v317
          %v412 = vunpack.c.h.b16 %v317
          %v413 = vunpack.c.l.b16 %v318
          %v414 = vunpack.c.h.b16 %v318
          %v415 = vunpack.c.l.b16 %v319
          %v416 = vunpack.c.h.b16 %v319
          %v417 = vunpack.c.l.b16 %v320
          %v418 = vunpack.c.h.b16 %v320
          %v419 = vunpack.c.l.b16 %v321
          %v420 = vunpack.c.h.b16 %v321
          %v421 = vunpack.c.l.b16 %v322
          %v422 = vunpack.c.h.b16 %v322
          %v423 = vunpack.c.l.b16 %v323
          %v424 = vunpack.c.h.b16 %v323
          %v425 = vunpack.c.l.b16 %v324
          %v426 = vunpack.c.h.b16 %v324
          %v427 = vunpack.c.l.b16 %v325
          %v428 = vunpack.c.h.b16 %v325
          %v429 = vunpack.c.l.b16 %v326
          %v430 = vunpack.c.h.b16 %v326
          %v431 = vunpack.c.l.b16 %v327
          %v432 = vunpack.c.h.b16 %v327
          %v433 = vunpack.c.l.b16 %v328
          %v434 = vunpack.c.h.b16 %v328
          %v435 = vunpack.c.l.b16 %v329
          %v436 = vunpack.c.h.b16 %v329
          %v437 = vunpack.c.l.b16 %v330
          %v438 = vunpack.c.h.b16 %v330
          %v439 = vunpack.c.l.b16 %v331
          %v440 = vunpack.c.h.b16 %v331
          %v441 = vunpack.c.l.b16 %v332
          %v442 = vunpack.c.h.b16 %v332
          %v443 = vunpack.c.l.b16 %v333
          %v444 = vunpack.c.h.b16 %v333
          %v445 = vunpack.c.l.b16 %v334
          %v446 = vunpack.c.h.b16 %v334
          %v447 = vunpack.c.l.b16 %v335
          %v448 = vunpack.c.h.b16 %v335
          %v449 = vunpack.c.l.b16 %v336
          %v450 = vunpack.c.h.b16 %v336
          %v451 = vunpack.c.l.b16 %v337
          %v452 = vunpack.c.h.b16 %v337
          %v453 = vunpack.c.l.b16 %v338
          %v454 = vunpack.c.h.b16 %v338
          %v455 = vpack.c.b16 %v395, %v391
          %v456 = vpack.c.b16 %v396, %v392
          %v457 = vpack.c.b16 %v397, %v393
          %v458 = vpack.c.b16 %v398, %v394
          %v459 = vpack.c.b16 %v403, %v399
          %v460 = vpack.c.b16 %v404, %v400
          %v461 = vpack.c.b16 %v405, %v401
          %v462 = vpack.c.b16 %v406, %v402
          %v463 = vpack.c.b16 %v411, %v407
          %v464 = vpack.c.b16 %v412, %v408
          %v465 = vpack.c.b16 %v413, %v409
          %v466 = vpack.c.b16 %v414, %v410
          %v467 = vpack.c.b16 %v419, %v415
          %v468 = vpack.c.b16 %v420, %v416
          %v469 = vpack.c.b16 %v421, %v417
          %v470 = vpack.c.b16 %v422, %v418
          %v471 = vpack.c.b16 %v427, %v423
          %v472 = vpack.c.b16 %v428, %v424
          %v473 = vpack.c.b16 %v429, %v425
          %v474 = vpack.c.b16 %v430, %v426
          %v475 = vpack.c.b16 %v435, %v431
          %v476 = vpack.c.b16 %v436, %v432
          %v477 = vpack.c.b16 %v437, %v433
          %v478 = vpack.c.b16 %v438, %v434
          %v479 = vpack.c.b16 %v443, %v439
          %v480 = vpack.c.b16 %v444, %v440
          %v481 = vpack.c.b16 %v445, %v441
          %v482 = vpack.c.b16 %v446, %v442
          %v483 = vpack.c.b16 %v451, %v447
          %v484 = vpack.c.b16 %v452, %v448
          %v485 = vpack.c.b16 %v453, %v449
          %v486 = vpack.c.b16 %v454, %v450
          %519 = vmatpush.bf16.msra.mxu0 %v483
          %520 = vmatpush.bf16.msra.mxu0 %v479
          %521 = vmatpush.bf16.msra.mxu0 %v475
          %522 = vmatpush.bf16.msra.mxu0 %v471
          %523 = vmatpush.bf16.msra.mxu0 %v467
          %524 = vmatpush.bf16.msra.mxu0 %v463
          %525 = vmatpush.bf16.msra.mxu0 %v459
          %526 = vmatpush.bf16.msra.mxu0 %v455
          %527 = vmatmul.bf16.gmra.mxu0 %v358
          %v528 = vpop.f32.mrf.mxu0
          %v529 = vadd.f32 0.0, %v528
          %v530 = vpop.f32.mrf.mxu0
          %531 = vdwg.mxu0
          %532 = vmatpush.bf16.msra.mxu0 %v484
          %533 = vmatpush.bf16.msra.mxu0 %v480
          %534 = vmatpush.bf16.msra.mxu0 %v476
          %535 = vmatpush.bf16.msra.mxu0 %v472
          %536 = vmatpush.bf16.msra.mxu0 %v468
          %537 = vmatpush.bf16.msra.mxu0 %v464
          %538 = vmatpush.bf16.msra.mxu0 %v460
          %539 = vmatpush.bf16.msra.mxu0 %v456
          %540 = vmatmul.bf16.gmra.mxu0 %v358
          %v541 = vpop.f32.mrf.mxu0
          %v542 = vadd.f32 0.0, %v541
          %v543 = vpop.f32.mrf.mxu0
          %544 = vdwg.mxu0
          %545 = vmatpush.bf16.msra.mxu0 %v485
          %546 = vmatpush.bf16.msra.mxu0 %v481
          %547 = vmatpush.bf16.msra.mxu0 %v477
          %548 = vmatpush.bf16.msra.mxu0 %v473
          %549 = vmatpush.bf16.msra.mxu0 %v469
          %550 = vmatpush.bf16.msra.mxu0 %v465
          %551 = vmatpush.bf16.msra.mxu0 %v461
          %552 = vmatpush.bf16.msra.mxu0 %v457
          %553 = vmatmul.bf16.gmra.mxu0 %v358
          %v554 = vpop.f32.mrf.mxu0
          %v555 = vadd.f32 0.0, %v554
          %v556 = vpop.f32.mrf.mxu0
          %557 = vdwg.mxu0
          %558 = vmatpush.bf16.msra.mxu0 %v486
          %559 = vmatpush.bf16.msra.mxu0 %v482
          %560 = vmatpush.bf16.msra.mxu0 %v478
          %561 = vmatpush.bf16.msra.mxu0 %v474
          %562 = vmatpush.bf16.msra.mxu0 %v470
          %563 = vmatpush.bf16.msra.mxu0 %v466
          %564 = vmatpush.bf16.msra.mxu0 %v462
          %565 = vmatpush.bf16.msra.mxu0 %v458
          %566 = vmatmul.bf16.gmra.mxu0 %v358
          %v567 = vpop.f32.mrf.mxu0
          %v568 = vadd.f32 0.0, %v567
          %v569 = vpop.f32.mrf.mxu0
          %570 = vdwg.mxu0
          %v571 = vadd.f32 %v354, %v529
          %v572 = vadd.f32 %v355, %v542
          %v573 = vadd.f32 %v356, %v555
          %v574 = vadd.f32 %v357, %v568
          %v575 = vxor.u32 %v571, 2147483648
          %v576 = vmul.f32 %v575, 1.442695
          %v577 = vpow.pop %v576
          %v578 = vadd.f32 %v577, 1.0
          %v579 = vrcp.pop %v578
          %v580 = vmul.f32 %v578, %v579
          %v581 = vsub.f32 1.0, %v580
          %v582 = vmul.f32 %v579, %v581
          %v583 = vadd.f32 %v579, %v582
          %vm584 = vweird.f32 %v578
          %vm585 = vweird.f32 %v579
          %vm586 = vmor %vm584, %vm585
          %v587 = vsel %vm586, %v579, %v583
          %v588 = vand.u32 2147483647, %v578
          %vm589 = vcmp.eq.f32.partialorder %v588, 8.507059e+37
          %v590 = vand.u32 %v578, 2147483648
          %v591 = vor.u32 1.1754944e-38, %v590
          %v592 = vsel %vm589, %v591, %v587
          %v593 = vmul.f32 1.0, %v592
          %v594 = vxor.u32 %v572, 2147483648
          %v595 = vmul.f32 %v594, 1.442695
          %v596 = vpow.pop %v595
          %v597 = vadd.f32 %v596, 1.0
          %v598 = vrcp.pop %v597
          %v599 = vmul.f32 %v597, %v598
          %v600 = vsub.f32 1.0, %v599
          %v601 = vmul.f32 %v598, %v600
          %v602 = vadd.f32 %v598, %v601
          %vm603 = vweird.f32 %v597
          %vm604 = vweird.f32 %v598
          %vm605 = vmor %vm603, %vm604
          %v606 = vsel %vm605, %v598, %v602
          %v607 = vand.u32 2147483647, %v597
          %vm608 = vcmp.eq.f32.partialorder %v607, 8.507059e+37
          %v609 = vand.u32 %v597, 2147483648
          %v610 = vor.u32 1.1754944e-38, %v609
          %v611 = vsel %vm608, %v610, %v606
          %v612 = vmul.f32 1.0, %v611
          %v613 = vtanh.pop %v573
          %v614 = vxor.u32 %v574, 2147483648
          %v615 = vmul.f32 %v614, 1.442695
          %v616 = vpow.pop %v615
          %v617 = vadd.f32 %v616, 1.0
          %v618 = vrcp.pop %v617
          %v619 = vmul.f32 %v617, %v618
          %v620 = vsub.f32 1.0, %v619
          %v621 = vmul.f32 %v618, %v620
          %v622 = vadd.f32 %v618, %v621
          %vm623 = vweird.f32 %v617
          %vm624 = vweird.f32 %v618
          %vm625 = vmor %vm623, %vm624
          %v626 = vsel %vm625, %v618, %v622
          %v627 = vand.u32 2147483647, %v617
          %vm628 = vcmp.eq.f32.partialorder %v627, 8.507059e+37
          %v629 = vand.u32 %v617, 2147483648
          %v630 = vor.u32 1.1754944e-38, %v629
          %v631 = vsel %vm628, %v630, %v626
          %v632 = vmul.f32 1.0, %v631
          %v633 = vmul.f32 %v612, %v348
          %v634 = vmul.f32 %v593, %v613
          %v635 = vadd.f32 %v633, %v634
          %v636 = vtanh.pop %v635
          %v637 = vmul.f32 %v632, %v636
          %s638 = smul.u32 %s342, 8
          %s639 = scalar_lea.vmem %s296, %s638 [#allocation12]
          %640 = vst [vmem:[%s639] sm:$0xff] %v637
        $region61: #{tpu_custom_call.1} parent=35 // loop_footer
          %s346 = sadd.s32 1, %s342
        $region62: #{tpu_custom_call.1} parent=35 // loop_footer_branch
          %341 = sbr.rel target = $region58
        $region63: #{tpu_custom_call.1} parent=35 // loop_exit
          _
        %641 = vst [vmem:[#allocation2] sm:$0xff] %v347
        %642 = vst [vmem:[#allocation3] sm:$0xff] %v348
        %s643 = sand.u32 %s146, 1
        %s644 = scalar_lea.sflag [#allocation6], %s643
        %s645 = sand.u32 %s146, 1
        %s646 = smul.addr %s645, 128
        %s647 = scalar_lea.vmem [#allocation12], %s646
        // Predicated region
        $region64: #{tpu_custom_call.1} parent=35 // pred_check
          %p648 = pneg %p156
        $region65: #{tpu_custom_call.1} parent=35 // pred_check_branch
          %650 = sbr.rel (%p648) target = $region67
        $region66: #{tpu_custom_call.1} parent=35 // pred_region
          %s651 = smul.u32 16, %s28
          %653 = vsyncadd %s644, 0
          %s654 = sadd.s32 %s27, %s651
          %s655 = smul.addr %s654, 8
          %s656 = scalar_lea.hbm %s4, %s655
          %s657 = sshll.u32 %s647, 4
          %s658 = int_to_ptr.vmem [resolvable:$true] %s657
          %s659 = sshll.u32 %s656, 4
          %s660 = int_to_ptr.hbm [resolvable:$true] %s659
          %665 = dma.vmem_to_hbm [thread:$0]  %s658, 2048, %s660, %s644, 128, 128, 8
        $region67: #{tpu_custom_call.1} parent=35 // pred_fallthru
          _
      $region36: #{tpu_custom_call.1} parent=5 // pred_fallthru
        _
      %p666 = scmp.le.s32.totalorder 2, %s18
      // Predicated region
      $region68: #{tpu_custom_call.1} parent=5 // pred_check
        %p667 = pneg %p666
      $region69: #{tpu_custom_call.1} parent=5 // pred_check_branch
        %669 = sbr.rel (%p667) target = $region71
      $region70: #{tpu_custom_call.1} parent=5 // pred_region
        %s670 = ssub.s32 %s18, 2
        // Predicated region
        $region72: #{tpu_custom_call.1} parent=70 // pred_check
          %p671 = pneg %p162
        $region73: #{tpu_custom_call.1} parent=70 // pred_check_branch
          %673 = sbr.rel (%p671) target = $region75
        $region74: #{tpu_custom_call.1} parent=70 // pred_region
          %s674 = sand.u32 %s147, 1
          %s675 = scalar_lea.sflag [#allocation6], %s674
          %s676 = sand.u32 %s147, 1
          %s677 = smul.addr %s676, 128
          %s678 = scalar_lea.vmem [#allocation12], %s677
          %680 = dma.done %s675, 2048
        $region75: #{tpu_custom_call.1} parent=70 // pred_fallthru
          _
      $region71: #{tpu_custom_call.1} parent=5 // pred_fallthru
        _
    $region6: #{tpu_custom_call.1} parent=1 // loop_footer
      %s22 = sadd.s32 1, %s18
    $region7: #{tpu_custom_call.1} parent=1 // loop_footer_branch
      %17 = sbr.rel target = $region3
    $region8: #{tpu_custom_call.1} parent=1 // loop_exit
      _
    %681 = vsyncpa [#allocation5], 1
    %s682 = scalar_lea.sflag [#allocation5], 1
    %683 = vsyncpa %s682, 1
    %684 = vsyncpa [#allocation8], 1
    %685 = vsyncpa [#allocation11], 1
    %686 = vsyncpa [#allocation6], 1
    %s687 = scalar_lea.sflag [#allocation6], 1
    %688 = vsyncpa %s687, 1

</llo_original>
